<compile_context>
chip_gen: v6e
topology: v6e:2x2x1
jax: 0.10.0
libtpu: 0.0.40
codegen_flags: <defaults>
</compile_context>

<pallas_src>
import jax
import jax.numpy as jnp
from jax.experimental import pallas as pl
from jax.experimental.pallas import tpu as pltpu


def critic_kernel(s_ref, a_ref, w1_ref, b1_ref, w2_ref, b2_ref,
                  w3_ref, b3_ref, o_ref):
    bf16 = jnp.bfloat16

    # fc1: fuse torch.cat in-kernel (lane-axis concat) -> one MXU push, K=S+A.
    x = jnp.concatenate([s_ref[...], a_ref[...]], axis=-1).astype(bf16)  # [TB, S+A]
    h1 = jnp.dot(x, w1_ref[...], preferred_element_type=jnp.float32)
    h1 = jnp.maximum(h1 + b1_ref[...], 0.0)                              # [TB, 256]

    # fc2 on the MXU, bf16 inputs, f32 accumulate.
    h2 = jnp.dot(h1.astype(bf16), w2_ref[...],
                 preferred_element_type=jnp.float32)
    h2 = jnp.maximum(h2 + b2_ref[...], 0.0)                              # [TB, 256]

    # fc3 (out_features == 1): VPU multiply + XLU lane reduction instead of a
    # 1-column MXU matmul; transpose the [TB, 1] column to a lane-dense
    # [1, TB] row (rides the otherwise-idle XLU slot) for unmasked stores.
    q = jnp.sum(h2 * w3_ref[...], axis=-1, keepdims=True) + b3_ref[...]  # [TB, 1]
    o_ref[...] = jnp.transpose(q).astype(o_ref.dtype)                    # [1, TB]


def _num_tensorcores_per_device():
    """2 for v7x (two TensorCores per chip), 1 otherwise (v5e/v6e)."""
    try:
        kind = jax.devices()[0].device_kind.lower()
    except Exception:
        return 1
    return 2 if ("v7" in kind or "7x" in kind) else 1


def _round_up(x, m):
    return ((x + m - 1) // m) * m


def critic_forward(state, action, params, *, max_rows_per_tile=2048):
    """state: [B, state_dim], action: [B, action_dim] -> q: [B, 1]."""
    w1, b1, w2, b2, w3, b3 = params
    B, S = state.shape
    A = action.shape[1]
    H = w2.shape[0]

    # Generation-aware batch tiling:
    #   * v5e/v6e (1 TC): whole batch in one block -> zero extra grid steps.
    #   * v7x (2 TCs): exactly 2 parallel tiles (unless B is tiny), rounded to
    #     128 rows so blocks stay (8,128)-aligned and the lane-dense output
    #     row stays a multiple of 128.
    #   * Only tile further if a block would exceed max_rows_per_tile rows.
    num_cores = _num_tensorcores_per_device()
    n_tiles = max(num_cores, pl.cdiv(B, max_rows_per_tile))
    if B <= 8:
        n_tiles = 1
    if n_tiles == 1:
        TB = B
    else:
        TB = _round_up(pl.cdiv(B, n_tiles), 128)
        n_tiles = pl.cdiv(B, TB)
    out_cols = n_tiles * TB

    def batch_spec(cols):
        return pl.BlockSpec((TB, cols), lambda i: (i, 0))

    def resident(shape):
        return pl.BlockSpec(shape, lambda i: (0,) * len(shape))

    q_rows = pl.pallas_call(
        critic_kernel,
        out_shape=jax.ShapeDtypeStruct((1, out_cols), jnp.float32),
        grid=(n_tiles,),
        in_specs=[
            batch_spec(S),          # state   [TB, S]
            batch_spec(A),          # action  [TB, A]
            resident((S + A, H)),   # w1      (bf16)
            resident((1, H)),       # b1      (f32)
            resident((H, H)),       # w2      (bf16)
            resident((1, H)),       # b2      (f32)
            resident((1, H)),       # w3 row  (f32)
            resident((1, 1)),       # b3      (f32)
        ],
        out_specs=pl.BlockSpec((1, TB), lambda i: (0, i)),
        compiler_params=pltpu.CompilerParams(
            dimension_semantics=("parallel",),
        ),
    )(state, action, w1, b1, w2, b2, w3, b3)

    # Lane-dense [1, n_tiles*TB] row -> [B, 1] (drop tile padding).
    return q_rows.reshape(-1)[:B].reshape(B, 1)


def init_critic_params(key, state_dim, action_dim, hidden=256):
    """nn.Linear-style init; big weights stored bf16; single fused fc1 weight."""
    in1 = state_dim + action_dim
    k1, k2, k3, k4, k5, k6 = jax.random.split(key, 6)

    def uinit(k, shape, fan_in):
        bound = 1.0 / jnp.sqrt(jnp.float32(fan_in))
        return jax.random.uniform(k, shape, jnp.float32, -bound, bound)

    w1 = uinit(k1, (in1, hidden), in1).astype(jnp.bfloat16)      # [S+A, 256]
    b1 = uinit(k2, (1, hidden), in1)
    w2 = uinit(k3, (hidden, hidden), hidden).astype(jnp.bfloat16)
    b2 = uinit(k4, (1, hidden), hidden)
    w3 = uinit(k5, (1, hidden), hidden)                          # row for the reduce
    b3 = uinit(k6, (1, 1), hidden)
    return (w1, b1, w2, b2, w3, b3)


def critic_reference(state, action, params):
    """Pure-JAX reference with identical bf16-weight quantization."""
    w1, b1, w2, b2, w3, b3 = params
    bf16 = jnp.bfloat16
    x = jnp.concatenate([state, action], axis=1).astype(bf16)
    h1 = jnp.dot(x, w1, preferred_element_type=jnp.float32) + b1
    h1 = jnp.maximum(h1, 0.0)
    h2 = jnp.dot(h1.astype(bf16), w2, preferred_element_type=jnp.float32) + b2
    h2 = jnp.maximum(h2, 0.0)
    return jnp.sum(h2 * w3, axis=-1, keepdims=True) + b3


if __name__ == "__main__":
    batch, state_dim, action_dim = 2, 16, 8

    key = jax.random.PRNGKey(0)
    kp, ks, ka = jax.random.split(key, 3)

    params = init_critic_params(kp, state_dim, action_dim)
    state = jax.random.normal(ks, (batch, state_dim), jnp.float32)
    action = jax.random.normal(ka, (batch, action_dim), jnp.float32)

    q = jax.block_until_ready(critic_forward(state, action, params))
    q_ref = critic_reference(state, action, params)
    assert q.shape == (batch, 1), q.shape
    assert jnp.allclose(q, q_ref, atol=2e-3, rtol=2e-3), (q, q_ref)

    # Training-sized batch: single block on v5e/v6e, two parallel tiles on v7x.
    big_b = 512
    ks2, ka2 = jax.random.split(jax.random.PRNGKey(1))
    state_b = jax.random.normal(ks2, (big_b, state_dim), jnp.float32)
    action_b = jax.random.normal(ka2, (big_b, action_dim), jnp.float32)
    qb = jax.block_until_ready(critic_forward(state_b, action_b, params))
    qb_ref = critic_reference(state_b, action_b, params)
    assert qb.shape == (big_b, 1), qb.shape
    assert jnp.allclose(qb, qb_ref, atol=2e-3, rtol=2e-3)

    print("KERNEL_OK")
</pallas_src>

<mosaic_0001>
module attributes {stable_mosaic.version = 11 : i64} {
  func.func @critic_kernel(%arg0: i32, %arg1: memref<2x16xf32, #tpu.memory_space<vmem>>, %arg2: memref<2x8xf32, #tpu.memory_space<vmem>>, %arg3: memref<24x256xbf16, #tpu.memory_space<vmem>>, %arg4: memref<1x256xf32, #tpu.memory_space<vmem>>, %arg5: memref<256x256xbf16, #tpu.memory_space<vmem>>, %arg6: memref<1x256xf32, #tpu.memory_space<vmem>>, %arg7: memref<1x256xf32, #tpu.memory_space<vmem>>, %arg8: memref<1x1xf32, #tpu.memory_space<vmem>>, %arg9: memref<1x2xf32, #tpu.memory_space<vmem>>) attributes {dimension_semantics = [#tpu.dimension_semantics<parallel>], iteration_bounds = array<i64: 1>, scalar_prefetch = 0 : i64, scratch_operands = 0 : i64, tpu.core_type = #tpu.core_type<tc>, window_params = [{transform_indices = @transform_0, window_bounds = array<i64: 2, 16>}, {transform_indices = @transform_1, window_bounds = array<i64: 2, 8>}, {pipeline_mode = #tpu.pipeline_mode<synchronous>, transform_indices = @transform_2, window_bounds = array<i64: 24, 256>}, {pipeline_mode = #tpu.pipeline_mode<synchronous>, transform_indices = @transform_3, window_bounds = array<i64: 1, 256>}, {pipeline_mode = #tpu.pipeline_mode<synchronous>, transform_indices = @transform_4, window_bounds = array<i64: 256, 256>}, {pipeline_mode = #tpu.pipeline_mode<synchronous>, transform_indices = @transform_5, window_bounds = array<i64: 1, 256>}, {pipeline_mode = #tpu.pipeline_mode<synchronous>, transform_indices = @transform_6, window_bounds = array<i64: 1, 256>}, {pipeline_mode = #tpu.pipeline_mode<synchronous>, transform_indices = @transform_7, window_bounds = array<i64: 1, 1>}, {transform_indices = @transform_8, window_bounds = array<i64: 1, 2>}]} {
    %c0 = arith.constant 0 : index
    %c0_0 = arith.constant 0 : index
    %0 = vector.load %arg1[%c0, %c0_0] : memref<2x16xf32, #tpu.memory_space<vmem>>, vector<2x16xf32>
    %c0_1 = arith.constant 0 : index
    %c0_2 = arith.constant 0 : index
    %1 = vector.load %arg2[%c0_1, %c0_2] : memref<2x8xf32, #tpu.memory_space<vmem>>, vector<2x8xf32>
    %2 = tpu.concatenate %0, %1 in 1 : vector<2x16xf32>, vector<2x8xf32> -> vector<2x24xf32>
    %3 = arith.truncf %2 : vector<2x24xf32> to vector<2x24xbf16>
    %c0_3 = arith.constant 0 : index
    %c0_4 = arith.constant 0 : index
    %4 = vector.load %arg3[%c0_3, %c0_4] : memref<24x256xbf16, #tpu.memory_space<vmem>>, vector<24x256xbf16>
    %cst = arith.constant dense<0.000000e+00> : vector<2x256xf32>
    %5 = tpu.matmul %3, %4, %cst {dimension_numbers = #tpu.dot_dimension_numbers<[1], [0], [0], [1], [0, 0, 1, 1], [], []>} : vector<2x24xbf16>, vector<24x256xbf16>, vector<2x256xf32> -> vector<2x256xf32>
    %c0_5 = arith.constant 0 : index
    %c0_6 = arith.constant 0 : index
    %6 = vector.load %arg4[%c0_5, %c0_6] : memref<1x256xf32, #tpu.memory_space<vmem>>, vector<1x256xf32>
    %7 = vector.broadcast %6 : vector<1x256xf32> to vector<2x256xf32>
    %8 = arith.addf %5, %7 : vector<2x256xf32>
    %cst_7 = arith.constant 0.000000e+00 : f32
    %9 = vector.broadcast %cst_7 : f32 to vector<2x256xf32>
    %10 = arith.maximumf %8, %9 : vector<2x256xf32>
    %11 = arith.truncf %10 : vector<2x256xf32> to vector<2x256xbf16>
    %c0_8 = arith.constant 0 : index
    %c0_9 = arith.constant 0 : index
    %12 = vector.load %arg5[%c0_8, %c0_9] : memref<256x256xbf16, #tpu.memory_space<vmem>>, vector<256x256xbf16>
    %cst_10 = arith.constant dense<0.000000e+00> : vector<2x256xf32>
    %13 = tpu.matmul %11, %12, %cst_10 {dimension_numbers = #tpu.dot_dimension_numbers<[1], [0], [0], [1], [0, 0, 1, 1], [], []>} : vector<2x256xbf16>, vector<256x256xbf16>, vector<2x256xf32> -> vector<2x256xf32>
    %c0_11 = arith.constant 0 : index
    %c0_12 = arith.constant 0 : index
    %14 = vector.load %arg6[%c0_11, %c0_12] : memref<1x256xf32, #tpu.memory_space<vmem>>, vector<1x256xf32>
    %15 = vector.broadcast %14 : vector<1x256xf32> to vector<2x256xf32>
    %16 = arith.addf %13, %15 : vector<2x256xf32>
    %cst_13 = arith.constant 0.000000e+00 : f32
    %17 = vector.broadcast %cst_13 : f32 to vector<2x256xf32>
    %18 = arith.maximumf %16, %17 : vector<2x256xf32>
    %c0_14 = arith.constant 0 : index
    %c0_15 = arith.constant 0 : index
    %19 = vector.load %arg7[%c0_14, %c0_15] : memref<1x256xf32, #tpu.memory_space<vmem>>, vector<1x256xf32>
    %20 = vector.broadcast %19 : vector<1x256xf32> to vector<2x256xf32>
    %21 = arith.mulf %18, %20 : vector<2x256xf32>
    %cst_16 = arith.constant dense<0.000000e+00> : vector<2xf32>
    %22 = vector.multi_reduction <add>, %21, %cst_16 [1] : vector<2x256xf32> to vector<2xf32>
    %23 = vector.shape_cast %22 : vector<2xf32> to vector<2x1xf32>
    %c0_17 = arith.constant 0 : index
    %c0_18 = arith.constant 0 : index
    %24 = vector.load %arg8[%c0_17, %c0_18] : memref<1x1xf32, #tpu.memory_space<vmem>>, vector<1x1xf32>
    %25 = vector.broadcast %24 : vector<1x1xf32> to vector<2x1xf32>
    %26 = arith.addf %23, %25 : vector<2x1xf32>
    %27 = tpu.transpose %26, [1, 0] : vector<2x1xf32> -> vector<1x2xf32>
    %c0_19 = arith.constant 0 : index
    %c0_20 = arith.constant 0 : index
    %28 = vector.load %arg9[%c0_19, %c0_20] : memref<1x2xf32, #tpu.memory_space<vmem>>, vector<1x2xf32>
    tpu.vector_store %arg9[%c0_19, %c0_20], %27 {strides = array<i32>} : memref<1x2xf32, #tpu.memory_space<vmem>>, vector<1x2xf32>,
    return
  }
  func.func @transform_0(%arg0: i32) -> (i32, i32) {
    %c0_i32 = arith.constant 0 : i32
    %c0_i32_0 = arith.constant 0 : i32
    return %arg0, %c0_i32 : i32, i32
  }
  func.func @transform_1(%arg0: i32) -> (i32, i32) {
    %c0_i32 = arith.constant 0 : i32
    %c0_i32_0 = arith.constant 0 : i32
    return %arg0, %c0_i32 : i32, i32
  }
  func.func @transform_2(%arg0: i32) -> (i32, i32) {
    %c0_i32 = arith.constant 0 : i32
    %c0_i32_0 = arith.constant 0 : i32
    %c0_i32_1 = arith.constant 0 : i32
    return %c0_i32, %c0_i32_0 : i32, i32
  }
  func.func @transform_3(%arg0: i32) -> (i32, i32) {
    %c0_i32 = arith.constant 0 : i32
    %c0_i32_0 = arith.constant 0 : i32
    %c0_i32_1 = arith.constant 0 : i32
    return %c0_i32, %c0_i32_0 : i32, i32
  }
  func.func @transform_4(%arg0: i32) -> (i32, i32) {
    %c0_i32 = arith.constant 0 : i32
    %c0_i32_0 = arith.constant 0 : i32
    %c0_i32_1 = arith.constant 0 : i32
    return %c0_i32, %c0_i32_0 : i32, i32
  }
  func.func @transform_5(%arg0: i32) -> (i32, i32) {
    %c0_i32 = arith.constant 0 : i32
    %c0_i32_0 = arith.constant 0 : i32
    %c0_i32_1 = arith.constant 0 : i32
    return %c0_i32, %c0_i32_0 : i32, i32
  }
  func.func @transform_6(%arg0: i32) -> (i32, i32) {
    %c0_i32 = arith.constant 0 : i32
    %c0_i32_0 = arith.constant 0 : i32
    %c0_i32_1 = arith.constant 0 : i32
    return %c0_i32, %c0_i32_0 : i32, i32
  }
  func.func @transform_7(%arg0: i32) -> (i32, i32) {
    %c0_i32 = arith.constant 0 : i32
    %c0_i32_0 = arith.constant 0 : i32
    %c0_i32_1 = arith.constant 0 : i32
    return %c0_i32, %c0_i32_0 : i32, i32
  }
  func.func @transform_8(%arg0: i32) -> (i32, i32) {
    %c0_i32 = arith.constant 0 : i32
    %c0_i32_0 = arith.constant 0 : i32
    return %c0_i32, %arg0 : i32, i32
  }
}

</mosaic_0001>

<llo_original>
// kernel: tpu_custom_call.1
$region0: #{tpu_custom_call.1}
  #allocation0 [shape = 'u32[]', space=smem, size = 0x4, offset = 0x4, fixed_abs, tag = 'smem constant byte address 0x4 - core index']
  #allocation1 [shape = 'u32[144,128]{1,0:T(1,128)}', space=vmem, size = 0x12000, scoped, tag = 'internal scratch']
  #allocation2 [shape = 'f32[1,1]{1,0:T(1,128)S(1)}', space=vmem, size = 0x200, scoped, tag = 'scoped memory for tpu_custom_call.1']
  %s0 = inlined_call_operand.vmem [shape: f32[2,16], index: 0, kind: input, shape index: {}]
  %s1 = inlined_call_operand.hbm [shape: f32[2,8], index: 1, kind: input, shape index: {}]
  %s2 = inlined_call_operand.hbm [shape: bf16[24,256], index: 2, kind: input, shape index: {}]
  %s3 = inlined_call_operand.vmem [shape: f32[1,256], index: 3, kind: input, shape index: {}]
  %s4 = inlined_call_operand.hbm [shape: bf16[256,256], index: 4, kind: input, shape index: {}]
  %s5 = inlined_call_operand.vmem [shape: f32[1,256], index: 5, kind: input, shape index: {}]
  %s6 = inlined_call_operand.vmem [shape: f32[1,256], index: 6, kind: input, shape index: {}]
  %s7 = inlined_call_operand.<no memory space> [shape: f32[1,1], index: 7, kind: input, shape index: {}]
  %s8 = inlined_call_operand.hbm [shape: f32[1,2], index: 8, kind: output, shape index: {}]
  %s9 = sld [smem:[#allocation0]]
  $region54: #{tpu_custom_call.1} parent=0
    _
  %s11 = ssub.s32 1, %s9
  %s12 = scalar_select 0, %s11, %s9
  %v13 = vstv %s7
  %14 = vst [vmem:[#allocation2] sm:$0x1] %v13
  $region1: #{tpu_custom_call.1} parent=0
    #allocation3 [shape = 'u8[1024]{0}', space=vmem, size = 0x400, scoped, tag = 'input window, operand 1, single buffered']
    #allocation4 [shape = 's32[1]{0}', space=sflag, size = 0x4, scoped, tag = 'scoped memory for tpu_custom_call.1']
    #allocation5 [shape = 's32[1]{0}', space=sflag, size = 0x4, scoped, tag = 'scoped memory for tpu_custom_call.1']
    #allocation6 [shape = 'u8[12288]{0}', space=vmem, size = 0x3000, scoped, tag = 'input window, operand 2, single buffered']
    #allocation7 [shape = 's32[1]{0}', space=sflag, size = 0x4, scoped, tag = 'scoped memory for tpu_custom_call.1']
    #allocation8 [shape = 'u8[131072]{0}', space=vmem, size = 0x20000, scoped, tag = 'input window, operand 4, single buffered']
    #allocation9 [shape = 'u8[512]{0}', space=vmem, size = 0x400, scoped, tag = 'output window, operand 0, single buffered']
    %15 = vsyncpa [#allocation4], 0
    %16 = vsyncpa [#allocation7], 0
    %17 = vsyncpa [#allocation5], 0
    // Predicated region
    $region2: #{tpu_custom_call.1} parent=1 // pred_check
      _
    $region3: #{tpu_custom_call.1} parent=1 // pred_check_branch
      %19 = sbr.rel (0) target = $region5
    $region4: #{tpu_custom_call.1} parent=1 // pred_region
      _
    $region5: #{tpu_custom_call.1} parent=1 // pred_fallthru
      _
    // Predicated region
    $region6: #{tpu_custom_call.1} parent=1 // pred_check
      _
    $region7: #{tpu_custom_call.1} parent=1 // pred_check_branch
      %21 = sbr.rel (0) target = $region9
    $region8: #{tpu_custom_call.1} parent=1 // pred_region
      %s23 = ssub.s32 32, 32
      %24 = vsyncadd [#allocation4], %s23
      %s26 = sshll.u32 [#allocation3], 4
      %s27 = int_to_ptr.vmem [resolvable:$true] %s26
      %29 = dma.hbm_to_vmem [thread:$0]  %s1, 32, %s27, [#allocation4]
    $region9: #{tpu_custom_call.1} parent=1 // pred_fallthru
      _
    // Predicated region
    $region10: #{tpu_custom_call.1} parent=1 // pred_check
      _
    $region11: #{tpu_custom_call.1} parent=1 // pred_check_branch
      %31 = sbr.rel (0) target = $region13
    $region12: #{tpu_custom_call.1} parent=1 // pred_region
      %s33 = ssub.s32 384, 384
      %34 = vsyncadd [#allocation7], %s33
      %s35 = sshll.u32 [#allocation6], 4
      %s36 = int_to_ptr.vmem [resolvable:$true] %s35
      %41 = dma.hbm_to_vmem [thread:$0]  %s2, 384, %s36, [#allocation7], 128, 128, 8
    $region13: #{tpu_custom_call.1} parent=1 // pred_fallthru
      _
    // Predicated region
    $region14: #{tpu_custom_call.1} parent=1 // pred_check
      _
    $region15: #{tpu_custom_call.1} parent=1 // pred_check_branch
      %43 = sbr.rel (0) target = $region17
    $region16: #{tpu_custom_call.1} parent=1 // pred_region
      _
    $region17: #{tpu_custom_call.1} parent=1 // pred_fallthru
      _
    // Predicated region
    $region18: #{tpu_custom_call.1} parent=1 // pred_check
      _
    $region19: #{tpu_custom_call.1} parent=1 // pred_check_branch
      %45 = sbr.rel (0) target = $region21
    $region20: #{tpu_custom_call.1} parent=1 // pred_region
      %s47 = ssub.s32 4096, 4096
      %48 = vsyncadd [#allocation7], %s47
      %s49 = sshll.u32 [#allocation8], 4
      %s50 = int_to_ptr.vmem [resolvable:$true] %s49
      %55 = dma.hbm_to_vmem [thread:$0]  %s4, 4096, %s50, [#allocation7], 128, 128, 8
    $region21: #{tpu_custom_call.1} parent=1 // pred_fallthru
      _
    // Predicated region
    $region22: #{tpu_custom_call.1} parent=1 // pred_check
      _
    $region23: #{tpu_custom_call.1} parent=1 // pred_check_branch
      %57 = sbr.rel (0) target = $region25
    $region24: #{tpu_custom_call.1} parent=1 // pred_region
      _
    $region25: #{tpu_custom_call.1} parent=1 // pred_fallthru
      _
    // Predicated region
    $region26: #{tpu_custom_call.1} parent=1 // pred_check
      _
    $region27: #{tpu_custom_call.1} parent=1 // pred_check_branch
      %59 = sbr.rel (0) target = $region29
    $region28: #{tpu_custom_call.1} parent=1 // pred_region
      _
    $region29: #{tpu_custom_call.1} parent=1 // pred_fallthru
      _
    // Predicated region
    $region30: #{tpu_custom_call.1} parent=1 // pred_check
      _
    $region31: #{tpu_custom_call.1} parent=1 // pred_check_branch
      %61 = sbr.rel (0) target = $region33
    $region32: #{tpu_custom_call.1} parent=1 // pred_region
      _
    $region33: #{tpu_custom_call.1} parent=1 // pred_fallthru
      _
    // Predicated region
    $region34: #{tpu_custom_call.1} parent=1 // pred_check
      _
    $region35: #{tpu_custom_call.1} parent=1 // pred_check_branch
      %63 = sbr.rel (0) target = $region37
    $region36: #{tpu_custom_call.1} parent=1 // pred_region
      %64 = dma.done [#allocation4], 32
    $region37: #{tpu_custom_call.1} parent=1 // pred_fallthru
      _
    // Predicated region
    $region38: #{tpu_custom_call.1} parent=1 // pred_check
      _
    $region39: #{tpu_custom_call.1} parent=1 // pred_check_branch
      %66 = sbr.rel (0) target = $region41
    $region40: #{tpu_custom_call.1} parent=1 // pred_region
      %67 = dma.done [#allocation7], 384
    $region41: #{tpu_custom_call.1} parent=1 // pred_fallthru
      _
    // Predicated region
    $region42: #{tpu_custom_call.1} parent=1 // pred_check
      _
    $region43: #{tpu_custom_call.1} parent=1 // pred_check_branch
      %69 = sbr.rel (0) target = $region45
    $region44: #{tpu_custom_call.1} parent=1 // pred_region
      %70 = dma.done [#allocation7], 4096
    $region45: #{tpu_custom_call.1} parent=1 // pred_fallthru
      _
    %v72 = vld [vmem:[%s0] sm:$0x3]
    %v73 = vld [vmem:[#allocation3] sm:$0x3]
    %75 = vrot.lane.b32.xlu0 %v73, 16
    %v76 = vpop.permute.xlu0 %75
    %vm78 = vcmask 130048
    %v79 = vsel %vm78, %v72, %v76
    %v80 = vpack.c.bf16 %v79, %v79
    %v81 = vld [vmem:[#allocation6] sm:$0xff]
    %v82 = vld [vmem:[#allocation6 + $0x8] sm:$0xff]
    %v83 = vld [vmem:[#allocation6 + $0x10] sm:$0xff]
    %v84 = vld [vmem:[%s3] sm:$0x3]
    %v86 = vlaneseq
    %v87 = vshrl.u32 %v86, 7
    %v88 = vsub.s32 0, %v87
    %v89 = vrot.slane %v84, %v88
    %v90 = vlaneseq
    %v91 = vshrl.u32 %v90, 7
    %v92 = vsub.s32 1, %v91
    %v93 = vrot.slane %v84, %v92
    %v99 = vunpack.c.l.b16 %v81
    %v100 = vunpack.c.h.b16 %v81
    %v101 = vunpack.c.l.b16 %v82
    %v102 = vunpack.c.h.b16 %v82
    %v103 = vunpack.c.l.b16 %v83
    %v104 = vunpack.c.h.b16 %v83
    %v105 = vpack.c.b16 %v101, %v99
    %v106 = vpack.c.b16 %v102, %v100
    %v107 = vpack.c.b16 %v103, %v103
    %v108 = vpack.c.b16 %v104, %v104
    %vm111 = vcmask 195584
    %v113 = vsel %vm111, %v80, 0
    %vm115 = vcmask 1043456
    %v117 = vsel %vm115, %v107, 0
    %v120 = vsel %vm115, %v108, 0
    %122 = vmatprep.subr.bf16.mxu0 0
    %123 = vmatpush1.bf16.msra.mxu0 0
    %124 = vmatprep.subr.bf16.mxu0 0
    %125 = vmatpush1.bf16.msra.mxu0 0
    %126 = vmatprep.subr.bf16.mxu0 0
    %127 = vmatpush1.bf16.msra.mxu0 0
    %128 = vmatprep.subr.bf16.mxu0 0
    %129 = vmatpush1.bf16.msra.mxu0 0
    %130 = vmatprep.subr.bf16.mxu0 0
    %131 = vmatpush1.bf16.msra.mxu0 0
    %132 = vmatprep.subr.bf16.mxu0 0
    %133 = vmatpush1.bf16.msra.mxu0 0
    %134 = vmatprep.subr.bf16.mxu0 %v120
    %135 = vmatpush1.bf16.msra.mxu0 %v117
    %136 = vmatprep.subr.bf16.mxu0 %v106
    %137 = vmatpush1.bf16.msra.mxu0 %v105
    %138 = vmatprep.subr.bf16.mxu0 0
    %139 = vmatpush2.bf16.msra.mxu0 0
    %140 = vmatprep.subr.bf16.mxu0 0
    %141 = vmatpush2.bf16.msra.mxu0 0
    %142 = vmatprep.subr.bf16.mxu0 0
    %143 = vmatpush2.bf16.msra.mxu0 0
    %144 = vmatprep.subr.bf16.mxu0 0
    %145 = vmatpush2.bf16.msra.mxu0 0
    %146 = vmatprep.subr.bf16.mxu0 0
    %147 = vmatpush2.bf16.msra.mxu0 0
    %148 = vmatprep.subr.bf16.mxu0 0
    %149 = vmatpush2.bf16.msra.mxu0 0
    %150 = vmatprep.subr.bf16.mxu0 0
    %151 = vmatpush2.bf16.msra.mxu0 0
    %152 = vmatprep.subr.bf16.mxu0 0
    %153 = vmatpush2.bf16.msra.mxu0 0
    %154 = vmatprep.mubr.bf16.mxu0 0
    %155 = vmatmul.mubr.bf16.gmra.mxu0 %v113
    %v156 = vpop.f32.mrf.mxu0
    %v157 = vadd.f32 %v89, %v156
    %v158 = vpop.f32.mrf.mxu0
    %v159 = vadd.f32 %v93, %v158
    %v160 = vpop.f32.mrf.mxu0
    %v161 = vpop.f32.mrf.mxu0
    %162 = vdwg.mxu0
    %v163 = vmax.f32 %v157, 0.0
    %v164 = vmax.f32 %v159, 0.0
    %v165 = vpack.c.bf16 %v163, %v163
    %v166 = vpack.c.bf16 %v164, %v164
    %v167 = vld [vmem:[#allocation8] sm:$0xff]
    %v168 = vld [vmem:[#allocation8 + $0x8] sm:$0xff]
    %v169 = vld [vmem:[#allocation8 + $0x10] sm:$0xff]
    %v170 = vld [vmem:[#allocation8 + $0x18] sm:$0xff]
    %v171 = vld [vmem:[#allocation8 + $0x20] sm:$0xff]
    %v172 = vld [vmem:[#allocation8 + $0x28] sm:$0xff]
    %v173 = vld [vmem:[#allocation8 + $0x30] sm:$0xff]
    %v174 = vld [vmem:[#allocation8 + $0x38] sm:$0xff]
    %v175 = vld [vmem:[#allocation8 + $0x40] sm:$0xff]
    %v176 = vld [vmem:[#allocation8 + $0x48] sm:$0xff]
    %v177 = vld [vmem:[#allocation8 + $0x50] sm:$0xff]
    %v178 = vld [vmem:[#allocation8 + $0x58] sm:$0xff]
    %v179 = vld [vmem:[#allocation8 + $0x60] sm:$0xff]
    %v180 = vld [vmem:[#allocation8 + $0x68] sm:$0xff]
    %v181 = vld [vmem:[#allocation8 + $0x70] sm:$0xff]
    %v182 = vld [vmem:[#allocation8 + $0x78] sm:$0xff]
    %v183 = vld [vmem:[#allocation8 + $0x80] sm:$0xff]
    %v184 = vld [vmem:[#allocation8 + $0x88] sm:$0xff]
    %v185 = vld [vmem:[#allocation8 + $0x90] sm:$0xff]
    %v186 = vld [vmem:[#allocation8 + $0x98] sm:$0xff]
    %v187 = vld [vmem:[#allocation8 + $0xa0] sm:$0xff]
    %v188 = vld [vmem:[#allocation8 + $0xa8] sm:$0xff]
    %v189 = vld [vmem:[#allocation8 + $0xb0] sm:$0xff]
    %v190 = vld [vmem:[#allocation8 + $0xb8] sm:$0xff]
    %v191 = vld [vmem:[#allocation8 + $0xc0] sm:$0xff]
    %v192 = vld [vmem:[#allocation8 + $0xc8] sm:$0xff]
    %v193 = vld [vmem:[#allocation8 + $0xd0] sm:$0xff]
    %v194 = vld [vmem:[#allocation8 + $0xd8] sm:$0xff]
    %v195 = vld [vmem:[#allocation8 + $0xe0] sm:$0xff]
    %v196 = vld [vmem:[#allocation8 + $0xe8] sm:$0xff]
    %v197 = vld [vmem:[#allocation8 + $0xf0] sm:$0xff]
    %v198 = vld [vmem:[#allocation8 + $0xf8] sm:$0xff]
    %v199 = vld [vmem:[%s5] sm:$0x3]
    %v201 = vlaneseq
    %v202 = vshrl.u32 %v201, 7
    %v203 = vsub.s32 0, %v202
    %v204 = vrot.slane %v199, %v203
    %v205 = vlaneseq
    %v206 = vshrl.u32 %v205, 7
    %v207 = vsub.s32 1, %v206
    %v208 = vrot.slane %v199, %v207
    %v243 = vunpack.c.l.b16 %v167
    %v244 = vunpack.c.h.b16 %v167
    %v245 = vunpack.c.l.b16 %v168
    %v246 = vunpack.c.h.b16 %v168
    %v247 = vunpack.c.l.b16 %v169
    %v248 = vunpack.c.h.b16 %v169
    %v249 = vunpack.c.l.b16 %v170
    %v250 = vunpack.c.h.b16 %v170
    %v251 = vunpack.c.l.b16 %v171
    %v252 = vunpack.c.h.b16 %v171
    %v253 = vunpack.c.l.b16 %v172
    %v254 = vunpack.c.h.b16 %v172
    %v255 = vunpack.c.l.b16 %v173
    %v256 = vunpack.c.h.b16 %v173
    %v257 = vunpack.c.l.b16 %v174
    %v258 = vunpack.c.h.b16 %v174
    %v259 = vunpack.c.l.b16 %v175
    %v260 = vunpack.c.h.b16 %v175
    %v261 = vunpack.c.l.b16 %v176
    %v262 = vunpack.c.h.b16 %v176
    %v263 = vunpack.c.l.b16 %v177
    %v264 = vunpack.c.h.b16 %v177
    %v265 = vunpack.c.l.b16 %v178
    %v266 = vunpack.c.h.b16 %v178
    %v267 = vunpack.c.l.b16 %v179
    %v268 = vunpack.c.h.b16 %v179
    %v269 = vunpack.c.l.b16 %v180
    %v270 = vunpack.c.h.b16 %v180
    %v271 = vunpack.c.l.b16 %v181
    %v272 = vunpack.c.h.b16 %v181
    %v273 = vunpack.c.l.b16 %v182
    %v274 = vunpack.c.h.b16 %v182
    %v275 = vunpack.c.l.b16 %v183
    %v276 = vunpack.c.h.b16 %v183
    %v277 = vunpack.c.l.b16 %v184
    %v278 = vunpack.c.h.b16 %v184
    %v279 = vunpack.c.l.b16 %v185
    %v280 = vunpack.c.h.b16 %v185
    %v281 = vunpack.c.l.b16 %v186
    %v282 = vunpack.c.h.b16 %v186
    %v283 = vunpack.c.l.b16 %v187
    %v284 = vunpack.c.h.b16 %v187
    %v285 = vunpack.c.l.b16 %v188
    %v286 = vunpack.c.h.b16 %v188
    %v287 = vunpack.c.l.b16 %v189
    %v288 = vunpack.c.h.b16 %v189
    %v289 = vunpack.c.l.b16 %v190
    %v290 = vunpack.c.h.b16 %v190
    %v291 = vunpack.c.l.b16 %v191
    %v292 = vunpack.c.h.b16 %v191
    %v293 = vunpack.c.l.b16 %v192
    %v294 = vunpack.c.h.b16 %v192
    %v295 = vunpack.c.l.b16 %v193
    %v296 = vunpack.c.h.b16 %v193
    %v297 = vunpack.c.l.b16 %v194
    %v298 = vunpack.c.h.b16 %v194
    %v299 = vunpack.c.l.b16 %v195
    %v300 = vunpack.c.h.b16 %v195
    %v301 = vunpack.c.l.b16 %v196
    %v302 = vunpack.c.h.b16 %v196
    %v303 = vunpack.c.l.b16 %v197
    %v304 = vunpack.c.h.b16 %v197
    %v305 = vunpack.c.l.b16 %v198
    %v306 = vunpack.c.h.b16 %v198
    %v307 = vpack.c.b16 %v245, %v243
    %v308 = vpack.c.b16 %v246, %v244
    %v309 = vpack.c.b16 %v249, %v247
    %v310 = vpack.c.b16 %v250, %v248
    %v311 = vpack.c.b16 %v253, %v251
    %v312 = vpack.c.b16 %v254, %v252
    %v313 = vpack.c.b16 %v257, %v255
    %v314 = vpack.c.b16 %v258, %v256
    %v315 = vpack.c.b16 %v261, %v259
    %v316 = vpack.c.b16 %v262, %v260
    %v317 = vpack.c.b16 %v265, %v263
    %v318 = vpack.c.b16 %v266, %v264
    %v319 = vpack.c.b16 %v269, %v267
    %v320 = vpack.c.b16 %v270, %v268
    %v321 = vpack.c.b16 %v273, %v271
    %v322 = vpack.c.b16 %v274, %v272
    %v323 = vpack.c.b16 %v277, %v275
    %v324 = vpack.c.b16 %v278, %v276
    %v325 = vpack.c.b16 %v281, %v279
    %v326 = vpack.c.b16 %v282, %v280
    %v327 = vpack.c.b16 %v285, %v283
    %v328 = vpack.c.b16 %v286, %v284
    %v329 = vpack.c.b16 %v289, %v287
    %v330 = vpack.c.b16 %v290, %v288
    %v331 = vpack.c.b16 %v293, %v291
    %v332 = vpack.c.b16 %v294, %v292
    %v333 = vpack.c.b16 %v297, %v295
    %v334 = vpack.c.b16 %v298, %v296
    %v335 = vpack.c.b16 %v301, %v299
    %v336 = vpack.c.b16 %v302, %v300
    %v337 = vpack.c.b16 %v305, %v303
    %v338 = vpack.c.b16 %v306, %v304
    %371 = vmatprep.subr.bf16.mxu0 %v322
    %372 = vmatpush1.bf16.msra.mxu0 %v321
    %373 = vmatprep.subr.bf16.mxu0 %v320
    %374 = vmatpush1.bf16.msra.mxu0 %v319
    %375 = vmatprep.subr.bf16.mxu0 %v318
    %376 = vmatpush1.bf16.msra.mxu0 %v317
    %377 = vmatprep.subr.bf16.mxu0 %v316
    %378 = vmatpush1.bf16.msra.mxu0 %v315
    %379 = vmatprep.subr.bf16.mxu0 %v314
    %380 = vmatpush1.bf16.msra.mxu0 %v313
    %381 = vmatprep.subr.bf16.mxu0 %v312
    %382 = vmatpush1.bf16.msra.mxu0 %v311
    %383 = vmatprep.subr.bf16.mxu0 %v310
    %384 = vmatpush1.bf16.msra.mxu0 %v309
    %385 = vmatprep.subr.bf16.mxu0 %v308
    %386 = vmatpush1.bf16.msra.mxu0 %v307
    %387 = vmatprep.subr.bf16.mxu0 %v338
    %388 = vmatpush2.bf16.msra.mxu0 %v337
    %389 = vmatprep.subr.bf16.mxu0 %v336
    %390 = vmatpush2.bf16.msra.mxu0 %v335
    %391 = vmatprep.subr.bf16.mxu0 %v334
    %392 = vmatpush2.bf16.msra.mxu0 %v333
    %393 = vmatprep.subr.bf16.mxu0 %v332
    %394 = vmatpush2.bf16.msra.mxu0 %v331
    %395 = vmatprep.subr.bf16.mxu0 %v330
    %396 = vmatpush2.bf16.msra.mxu0 %v329
    %397 = vmatprep.subr.bf16.mxu0 %v328
    %398 = vmatpush2.bf16.msra.mxu0 %v327
    %399 = vmatprep.subr.bf16.mxu0 %v326
    %400 = vmatpush2.bf16.msra.mxu0 %v325
    %401 = vmatprep.subr.bf16.mxu0 %v324
    %402 = vmatpush2.bf16.msra.mxu0 %v323
    %403 = vmatprep.mubr.bf16.mxu0 %v166
    %404 = vmatmul.mubr.bf16.gmra.mxu0 %v165
    %v405 = vpop.f32.mrf.mxu0
    %v406 = vadd.f32 %v204, %v405
    %v407 = vpop.f32.mrf.mxu0
    %v408 = vadd.f32 %v208, %v407
    %v409 = vpop.f32.mrf.mxu0
    %v410 = vpop.f32.mrf.mxu0
    %411 = vdwg.mxu0
    %v412 = vmax.f32 %v406, 0.0
    %v413 = vmax.f32 %v408, 0.0
    %v414 = vld [vmem:[%s6] sm:$0x3]
    %v416 = vlaneseq
    %v417 = vshrl.u32 %v416, 7
    %v418 = vsub.s32 0, %v417
    %v419 = vrot.slane %v414, %v418
    %v420 = vlaneseq
    %v421 = vshrl.u32 %v420, 7
    %v422 = vsub.s32 1, %v421
    %v423 = vrot.slane %v414, %v422
    %v426 = vmul.f32 %v412, %v419
    %v427 = vmul.f32 %v413, %v423
    %vm428 = vcmask 1041408
    %v429 = vsel %vm428, %v426, 0.0
    %v430 = vsel %vm428, %v427, 0.0
    %v431 = vadd.f32 %v429, %v430
    %432 = vadd.xlane.f32.xlu0 %v431
    %v433 = vpop.xlane.xlu0 %432
    %v434 = vld [vmem:[#allocation2] sm:$0x1]
    %v436 = vlaneseq
    %v437 = vshrl.u32 %v436, 7
    %v438 = vsub.s32 0, %v437
    %v439 = vrot.slane %v434, %v438
    %v441 = vadd.f32 %v433, %v439
    %442 = vxpose.xlu0.b32.start [1/16] %v441, 128
    %443 = vxpose.xlu0.b32.cont [2/16] 0.0, 128
    %444 = vxpose.xlu0.b32.cont [3/16] 0.0, 128
    %445 = vxpose.xlu0.b32.cont [4/16] 0.0, 128
    %446 = vxpose.xlu0.b32.cont [5/16] 0.0, 128
    %447 = vxpose.xlu0.b32.cont [6/16] 0.0, 128
    %448 = vxpose.xlu0.b32.cont [7/16] 0.0, 128
    %449 = vxpose.xlu0.b32.cont [8/16] 0.0, 128
    %450 = vxpose.xlu0.b32.cont [9/16] 0.0, 128
    %451 = vxpose.xlu0.b32.cont [10/16] 0.0, 128
    %452 = vxpose.xlu0.b32.cont [11/16] 0.0, 128
    %453 = vxpose.xlu0.b32.cont [12/16] 0.0, 128
    %454 = vxpose.xlu0.b32.cont [13/16] 0.0, 128
    %455 = vxpose.xlu0.b32.cont [14/16] 0.0, 128
    %456 = vxpose.xlu0.b32.cont [15/16] 0.0, 128
    %457 = vxpose.xlu0.b32.end [16/16] 0.0, 128
    %v458 = vpop.trf.xlu0
    %v459 = vpop.trf.xlu0
    %v460 = vpop.trf.xlu0
    %v461 = vpop.trf.xlu0
    %v462 = vpop.trf.xlu0
    %v463 = vpop.trf.xlu0
    %v464 = vpop.trf.xlu0
    %v465 = vpop.trf.xlu0
    %v466 = vpop.trf.xlu0
    %v467 = vpop.trf.xlu0
    %v468 = vpop.trf.xlu0
    %v469 = vpop.trf.xlu0
    %v470 = vpop.trf.xlu0
    %v471 = vpop.trf.xlu0
    %v472 = vpop.trf.xlu0
    %v473 = vpop.trf.xlu0
    %vm474 = vcmask 8192
    %475 = vst.msk [vmem:[#allocation9] sm:$0x1] %vm474, %v458
    // Predicated region
    $region46: #{tpu_custom_call.1} parent=1 // pred_check
      _
    $region47: #{tpu_custom_call.1} parent=1 // pred_check_branch
      %477 = sbr.rel (0) target = $region49
    $region48: #{tpu_custom_call.1} parent=1 // pred_region
      %s479 = ssub.s32 16, 16
      %480 = vsyncadd [#allocation5], %s479
      %s482 = sshll.u32 [#allocation9], 4
      %s483 = int_to_ptr.vmem [resolvable:$true] %s482
      %485 = dma.vmem_to_hbm [thread:$0]  %s483, 16, %s8, [#allocation5]
    $region49: #{tpu_custom_call.1} parent=1 // pred_fallthru
      _
    // Predicated region
    $region50: #{tpu_custom_call.1} parent=1 // pred_check
      _
    $region51: #{tpu_custom_call.1} parent=1 // pred_check_branch
      %487 = sbr.rel (0) target = $region53
    $region52: #{tpu_custom_call.1} parent=1 // pred_region
      %488 = dma.done [#allocation5], 16
    $region53: #{tpu_custom_call.1} parent=1 // pred_fallthru
      _
    %489 = vsyncpa [#allocation4], 1
    %490 = vsyncpa [#allocation7], 1
    %491 = vsyncpa [#allocation5], 1

</llo_original>
